<compile_context>
chip_gen: v7x
topology: tpu7x:2x2x1
jax: 0.10.0
libtpu: 0.0.40
codegen_flags: <defaults>
</compile_context>

<pallas_src>
import functools
import math
import re

import numpy as np
import jax
import jax.numpy as jnp
from jax.experimental import pallas as pl
from jax.experimental.pallas import tpu as pltpu


# ---------------------------------------------------------------------------
# neuron-string parsing (mirror of Neurons.xdata)
# ---------------------------------------------------------------------------
def parse_neuron(neuron: str):
    temp = neuron.replace(" ", "")
    parts = re.split(r"\+|-", temp)
    xx = []
    for s in parts:
        if "@" in s:
            xx.append(s[s.find("@") + 1:])
        elif "x" in s:
            xx.append(s)
    return xx


# Every supported term is finite at 0, which keeps zero-padding of x safe.
_ELEMENTWISE = {
    "x": lambda x: x,
    "tanh(x)": jnp.tanh,
    "sin(x)": jnp.sin,
    "cos(x)": jnp.cos,
    "exp(x)": jnp.exp,
    "relu(x)": lambda x: jnp.maximum(x, 0.0),
    "sigmoid(x)": jax.nn.sigmoid,
    "x*x": lambda x: x * x,
}


def term_fn(expr: str):
    expr = expr.strip().replace("torch.", "").replace("F.", "")
    if expr in _ELEMENTWISE:
        return _ELEMENTWISE[expr]
    # TODO(synk): arbitrary python expressions (eval() in the PyTorch code) are
    # not supported generically; only the elementwise table above is handled.
    raise ValueError(f"unsupported term expression: {expr!r}")


def _round_up(v: int, m: int) -> int:
    return (v + m - 1) // m * m


def _vmem_capacity_bytes() -> int:
    """Physical per-core VMEM (128 MiB v5e/v6e, 64 MiB v7x); conservative fallback."""
    try:
        cap = int(getattr(pltpu.get_tpu_info(), "vmem_capacity_bytes", 0))
        if cap > 0:
            return cap
    except Exception:
        pass
    return 64 * 1024 * 1024


# ---------------------------------------------------------------------------
# Kernel A ("batch_outer"): grid = (B_pad//tm [parallel], Fout_pad//tn [arbitrary]).
# The x tile and the per-term activation cache stay resident across the Fout
# axis; nonlinearities run once per batch tile (j == 0), not once per output
# tile.  One fused MXU dot against the K-stacked weight strip.
#   x_ref : (tm, Fin_pad)      w_ref : (n*Fin_pad, tn)   b_ref : (1, tn)
#   o_ref : (tm, tn)           t_ref : (tm, n*Fin_pad) VMEM scratch (matmul dtype)
# ---------------------------------------------------------------------------
def _neurons_kernel_cached(x_ref, w_ref, b_ref, o_ref, t_ref, *, term_fns, fin_pad):
    @pl.when(pl.program_id(1) == 0)
    def _fill_term_cache():
        x = x_ref[...].astype(jnp.float32)            # terms always in f32
        for k, fn in enumerate(term_fns):             # 128-aligned slice stores
            t_ref[:, k * fin_pad:(k + 1) * fin_pad] = fn(x).astype(t_ref.dtype)

    acc = jnp.dot(t_ref[...], w_ref[...], preferred_element_type=jnp.float32)
    o_ref[...] = (acc + b_ref[...].astype(jnp.float32)).astype(o_ref.dtype)


# ---------------------------------------------------------------------------
# Kernel B ("fout_outer"): grid = (Fout_pad//tn [parallel], B_pad//tm [parallel]).
# The weight strip is resident across the inner batch axis, so the full weight
# stack is DMA'd from HBM exactly once; terms are recomputed per tile and
# accumulated via per-term dots on 128-aligned static weight slices.
# ---------------------------------------------------------------------------
def _neurons_kernel_stream(x_ref, w_ref, b_ref, o_ref, *, term_fns, fin_pad):
    x = x_ref[...].astype(jnp.float32)
    mm_dt = w_ref.dtype
    acc = None
    for k, fn in enumerate(term_fns):
        part = jnp.dot(fn(x).astype(mm_dt),
                       w_ref[k * fin_pad:(k + 1) * fin_pad, :],
                       preferred_element_type=jnp.float32)
        acc = part if acc is None else acc + part
    o_ref[...] = (acc + b_ref[...].astype(jnp.float32)).astype(o_ref.dtype)


# ---------------------------------------------------------------------------
def neurons_forward(x, weights, bias, neuron: str, *,
                    matmul_dtype=jnp.bfloat16,
                    force_order=None, tile_m=None, tile_n=None):
    """Forward pass of `Neurons`.

    x: (B, in_features); weights: list of (out_features, in_features); bias: (out,).
    matmul_dtype: dtype of the MXU operands (bf16 default; terms + accumulation f32).
    """
    assert force_order in (None, "batch_outer", "fout_outer")
    xlist = parse_neuron(neuron)
    assert len(weights) == len(xlist), "weight length not equal to xdata"
    term_fns = [term_fn(s) for s in xlist]
    n = len(term_fns)

    B, Fin = x.shape
    Fout = weights[0].shape[0]

    # ---- lane/sublane-dense padded shapes ----------------------------------
    Fin_pad = _round_up(Fin, 128)
    Fout_pad = _round_up(Fout, 128)
    K_pad = n * Fin_pad

    mm_isz = np.dtype(matmul_dtype).itemsize
    io_isz = np.dtype(x.dtype).itemsize

    vmem_cap = _vmem_capacity_bytes()
    budget = max(int(vmem_cap * 0.4), 24 * 1024 * 1024)

    def _need_bytes(tm_, tn_):
        # double-buffered x / weight strip / out / bias  +  term-cache scratch
        return (2 * tm_ * Fin_pad * io_isz
                + 2 * K_pad * tn_ * mm_isz
                + 2 * tm_ * tn_ * io_isz
                + 2 * tn_ * 4
                + tm_ * K_pad * mm_isz)

    # ---- tile sizes ---------------------------------------------------------
    if tile_m is not None:
        tm = tile_m
    elif B <= 256:
        tm = _round_up(B, 8)
    else:
        # bigger batch tiles halve weight re-streaming; 512 only with >=96 MiB VMEM
        tm = 512 if (B >= 512 and vmem_cap >= 96 * 1024 * 1024) else 256
    if tile_m is None:
        while tm > 8 and _need_bytes(tm, 128) > budget:
            tm = max(8, _round_up(tm // 2, 8))
    B_pad = _round_up(B, tm)

    if tile_n is not None:
        tn = tile_n
    else:
        tn = 256 if (Fout_pad % 256 == 0 and _need_bytes(tm, 256) <= budget) else 128
    # TODO(synk): if _need_bytes(tm, tn) still exceeds the budget (huge Fin) the
    # K-axis accumulator split is required; not needed at these layer sizes.

    num_i = B_pad // tm
    num_j = Fout_pad // tn

    # ---- grid order: minimise HBM re-streaming ------------------------------
    if force_order is None:
        w_bytes = K_pad * Fout_pad * mm_isz
        x_bytes = B_pad * Fin_pad * io_isz
        # batch_outer re-streams the weights (num_i-1) extra times; fout_outer
        # re-streams x (num_j-1) extra times (and recomputes the terms).
        batch_outer = w_bytes * (num_i - 1) <= x_bytes * (num_j - 1)
    else:
        batch_outer = force_order == "batch_outer"

    # ---- operand prep (single pad/concat; no per-term full-buffer copies) ---
    x_p = x
    if Fin_pad != Fin:
        x_p = jnp.pad(x_p, ((0, 0), (0, Fin_pad - Fin)))
    if B_pad != B:
        x_p = jnp.pad(x_p, ((0, B_pad - B), (0, 0)))

    # TODO(synk): for repeated calls, hoist this weight packing to parameter
    # init time (it depends only on the parameters, not on x).
    parts = [jnp.pad(w.T.astype(matmul_dtype),
                     ((0, Fin_pad - Fin), (0, Fout_pad - Fout))) for w in weights]
    w_stack = parts[0] if n == 1 else jnp.concatenate(parts, axis=0)

    b_p = bias.astype(jnp.float32).reshape(1, Fout)
    if Fout_pad != Fout:
        b_p = jnp.pad(b_p, ((0, 0), (0, Fout_pad - Fout)))

    vmem_limit = int(min(max(2 * _need_bytes(tm, tn) + (1 << 20), 32 << 20), 112 << 20))

    if batch_outer:
        kernel = functools.partial(_neurons_kernel_cached,
                                   term_fns=term_fns, fin_pad=Fin_pad)
        grid = (num_i, num_j)
        in_specs = [
            pl.BlockSpec((tm, Fin_pad), lambda i, j: (i, 0)),   # x: resident over j
            pl.BlockSpec((K_pad, tn), lambda i, j: (0, j)),     # K-stacked weight strip
            pl.BlockSpec((1, tn), lambda i, j: (0, j)),         # bias tile
        ]
        out_specs = pl.BlockSpec((tm, tn), lambda i, j: (i, j))
        scratch_shapes = [pltpu.VMEM((tm, K_pad), matmul_dtype)]  # term cache
        dim_sem = ("parallel", "arbitrary")                       # scratch carries over j
    else:
        kernel = functools.partial(_neurons_kernel_stream,
                                   term_fns=term_fns, fin_pad=Fin_pad)
        grid = (num_j, num_i)
        in_specs = [
            pl.BlockSpec((tm, Fin_pad), lambda j, i: (i, 0)),
            pl.BlockSpec((K_pad, tn), lambda j, i: (0, j)),     # resident over i:
            pl.BlockSpec((1, tn), lambda j, i: (0, j)),         #   weights stream once
        ]
        out_specs = pl.BlockSpec((tm, tn), lambda j, i: (i, j))
        scratch_shapes = []
        dim_sem = ("parallel", "parallel")

    out_p = pl.pallas_call(
        kernel,
        out_shape=jax.ShapeDtypeStruct((B_pad, Fout_pad), x.dtype),
        grid=grid,
        in_specs=in_specs,
        out_specs=out_specs,
        scratch_shapes=scratch_shapes,
        compiler_params=pltpu.CompilerParams(
            dimension_semantics=dim_sem,
            vmem_limit_bytes=vmem_limit),
    )(x_p, w_stack, b_p)

    if B_pad != B or Fout_pad != Fout:
        out_p = out_p[:B, :Fout]
    return out_p


# ---------------------------------------------------------------------------
# deterministic parameter init (mirrors reset_parameters):
#   kaiming_uniform_(w, a=sqrt(5)) -> U(-1/sqrt(fan_in), 1/sqrt(fan_in))
#   bias                           -> U(-1/sqrt(fan_in), 1/sqrt(fan_in))
# ---------------------------------------------------------------------------
def init_params(key, in_features, out_features, neuron):
    n_terms = len(parse_neuron(neuron))
    bound = 1.0 / math.sqrt(in_features)
    keys = jax.random.split(key, n_terms + 1)
    weights = [
        jax.random.uniform(keys[i], (out_features, in_features),
                           minval=-bound, maxval=bound, dtype=jnp.float32)
        for i in range(n_terms)
    ]
    bias = jax.random.uniform(keys[-1], (out_features,),
                              minval=-bound, maxval=bound, dtype=jnp.float32)
    return weights, bias


def _reference(x, weights, bias, neuron):
    fns = [term_fn(s) for s in parse_neuron(neuron)]
    acc = jnp.zeros((x.shape[0], weights[0].shape[0]), dtype=jnp.float32)
    for fn, w in zip(fns, weights):
        acc = acc + fn(x) @ w.T
    return acc + bias


if __name__ == "__main__":
    # one 'x' per term (the PyTorch module requires neuron.count('x') == #terms)
    neuron = "x + tanh(x)"
    in_features, out_features, batch = 32, 32, 8

    key = jax.random.PRNGKey(0)
    kx, kp, kx2, kp2 = jax.random.split(key, 4)

    x = jax.random.normal(kx, (batch, in_features), dtype=jnp.float32)
    weights, bias = init_params(kp, in_features, out_features, neuron)
    ref = _reference(x, weights, bias, neuron)

    # (1) default path: bf16 MXU operands, f32 terms + f32 accumulation.
    fwd = jax.jit(lambda a, w, b: neurons_forward(a, w, b, neuron))
    out = jax.block_until_ready(fwd(x, weights, bias))
    assert out.shape == (batch, out_features)
    assert jnp.allclose(out, ref, atol=1e-1, rtol=1e-1), "bf16 path mismatch vs reference"

    # (2) exact f32 path.
    out_f32 = jax.block_until_ready(
        neurons_forward(x, weights, bias, neuron, matmul_dtype=jnp.float32))
    assert jnp.allclose(out_f32, ref, atol=1e-5, rtol=1e-5), "f32 path mismatch vs reference"

    # (3) multi-tile coverage of both grid orders (still small shapes, f32).
    b2, f_in2, f_out2 = 24, 160, 256
    x2 = jax.random.normal(kx2, (b2, f_in2), dtype=jnp.float32)
    weights2, bias2 = init_params(kp2, f_in2, f_out2, neuron)
    ref2 = _reference(x2, weights2, bias2, neuron)
    for order in ("batch_outer", "fout_outer"):
        o2 = jax.block_until_ready(
            neurons_forward(x2, weights2, bias2, neuron, matmul_dtype=jnp.float32,
                            force_order=order, tile_m=8, tile_n=128))
        assert o2.shape == (b2, f_out2)
        assert jnp.allclose(o2, ref2, atol=1e-4, rtol=1e-4), f"{order} mismatch vs reference"

    print("KERNEL_OK")
</pallas_src>

<mosaic_0001>
module attributes {stable_mosaic.version = 11 : i64} {
  func.func @_neurons_kernel_cached(%arg0: i32, %arg1: i32, %arg2: memref<8x128xf32, #tpu.memory_space<vmem>>, %arg3: memref<256x128xbf16, #tpu.memory_space<vmem>>, %arg4: memref<1x128xf32, #tpu.memory_space<vmem>>, %arg5: memref<8x128xf32, #tpu.memory_space<vmem>>, %arg6: memref<8x256xbf16, #tpu.memory_space<vmem>>) attributes {dimension_semantics = [#tpu.dimension_semantics<parallel>, #tpu.dimension_semantics<arbitrary>], iteration_bounds = array<i64: 1, 1>, scalar_prefetch = 0 : i64, scratch_operands = 1 : i64, tpu.core_type = #tpu.core_type<tc>, window_params = [{transform_indices = @transform_0, window_bounds = array<i64: 8, 128>}, {transform_indices = @transform_1, window_bounds = array<i64: 256, 128>}, {transform_indices = @transform_2, window_bounds = array<i64: 1, 128>}, {transform_indices = @transform_3, window_bounds = array<i64: 8, 128>}]} {
    %c0_i32 = arith.constant 0 : i32
    %0 = arith.cmpi eq, %arg1, %c0_i32 : i32
    %1 = arith.extui %0 : i1 to i32
    %c0_i32_0 = arith.constant 0 : i32
    %2 = arith.cmpi ne, %1, %c0_i32_0 : i32
    scf.if %2 {
      %c0_8 = arith.constant 0 : index
      %c0_9 = arith.constant 0 : index
      %10 = vector.load %arg2[%c0_8, %c0_9] : memref<8x128xf32, #tpu.memory_space<vmem>>, vector<8x128xf32>
      %11 = arith.truncf %10 : vector<8x128xf32> to vector<8x128xbf16>
      %c0_10 = arith.constant 0 : index
      %c0_11 = arith.constant 0 : index
      %12 = vector.load %arg6[%c0_10, %c0_11] : memref<8x256xbf16, #tpu.memory_space<vmem>>, vector<8x128xbf16>
      tpu.vector_store %arg6[%c0_10, %c0_11], %11 {strides = array<i32>} : memref<8x256xbf16, #tpu.memory_space<vmem>>, vector<8x128xbf16>,
      %13 = math.tanh %10 : vector<8x128xf32>
      %14 = arith.truncf %13 : vector<8x128xf32> to vector<8x128xbf16>
      %c0_12 = arith.constant 0 : index
      %c128 = arith.constant 128 : index
      %15 = vector.load %arg6[%c0_12, %c128] : memref<8x256xbf16, #tpu.memory_space<vmem>>, vector<8x128xbf16>
      tpu.vector_store %arg6[%c0_12, %c128], %14 {strides = array<i32>} : memref<8x256xbf16, #tpu.memory_space<vmem>>, vector<8x128xbf16>,
    } else {
    }
    %c0 = arith.constant 0 : index
    %c0_1 = arith.constant 0 : index
    %3 = vector.load %arg6[%c0, %c0_1] : memref<8x256xbf16, #tpu.memory_space<vmem>>, vector<8x256xbf16>
    %c0_2 = arith.constant 0 : index
    %c0_3 = arith.constant 0 : index
    %4 = vector.load %arg3[%c0_2, %c0_3] : memref<256x128xbf16, #tpu.memory_space<vmem>>, vector<256x128xbf16>
    %cst = arith.constant dense<0.000000e+00> : vector<8x128xf32>
    %5 = tpu.matmul %3, %4, %cst {dimension_numbers = #tpu.dot_dimension_numbers<[1], [0], [0], [1], [0, 0, 1, 1], [], []>} : vector<8x256xbf16>, vector<256x128xbf16>, vector<8x128xf32> -> vector<8x128xf32>
    %c0_4 = arith.constant 0 : index
    %c0_5 = arith.constant 0 : index
    %6 = vector.load %arg4[%c0_4, %c0_5] : memref<1x128xf32, #tpu.memory_space<vmem>>, vector<1x128xf32>
    %7 = vector.broadcast %6 : vector<1x128xf32> to vector<8x128xf32>
    %8 = arith.addf %5, %7 : vector<8x128xf32>
    %c0_6 = arith.constant 0 : index
    %c0_7 = arith.constant 0 : index
    %9 = vector.load %arg5[%c0_6, %c0_7] : memref<8x128xf32, #tpu.memory_space<vmem>>, vector<8x128xf32>
    tpu.vector_store %arg5[%c0_6, %c0_7], %8 {strides = array<i32>} : memref<8x128xf32, #tpu.memory_space<vmem>>, vector<8x128xf32>,
    return
  }
  func.func @transform_0(%arg0: i32, %arg1: i32) -> (i32, i32) {
    %c0_i32 = arith.constant 0 : i32
    %c0_i32_0 = arith.constant 0 : i32
    return %arg0, %c0_i32 : i32, i32
  }
  func.func @transform_1(%arg0: i32, %arg1: i32) -> (i32, i32) {
    %c0_i32 = arith.constant 0 : i32
    %c0_i32_0 = arith.constant 0 : i32
    return %c0_i32, %arg1 : i32, i32
  }
  func.func @transform_2(%arg0: i32, %arg1: i32) -> (i32, i32) {
    %c0_i32 = arith.constant 0 : i32
    %c0_i32_0 = arith.constant 0 : i32
    return %c0_i32, %arg1 : i32, i32
  }
  func.func @transform_3(%arg0: i32, %arg1: i32) -> (i32, i32) {
    %c0_i32 = arith.constant 0 : i32
    return %arg0, %arg1 : i32, i32
  }
}

</mosaic_0001>

<llo_original>
// kernel: _lambda_.1
$region0: #{_lambda_.1}
  #allocation0 [shape = 'u32[]', space=smem, size = 0x4, offset = 0x4, fixed_abs, tag = 'smem constant byte address 0x4 - core index']
  #allocation1 [shape = 'u32[144,128]{1,0:T(1,128)}', space=vmem, size = 0x12000, scoped, tag = 'internal scratch']
  #allocation2 [shape = 'bf16[8,256]{1,0:T(8,128)(2,1)}', space=vmem, size = 0x1000, scoped, tag = 'scratch operand']
  %s0 = inlined_call_operand.vmem [shape: f32[8,128], index: 0, kind: input, shape index: {}]
  %s1 = inlined_call_operand.vmem [shape: bf16[256,128], index: 1, kind: input, shape index: {}]
  %s2 = inlined_call_operand.vmem [shape: f32[1,128], index: 2, kind: input, shape index: {}]
  %s3 = inlined_call_operand.hbm [shape: f32[8,128], index: 3, kind: output, shape index: {}]
  %s4 = sld [smem:[#allocation0]]
  $region26: #{_lambda_.1} parent=0
    _
  %s6 = ssub.s32 1, %s4
  %s7 = scalar_select 0, %s6, %s4
  $region1: #{_lambda_.1} parent=0
    #allocation3 [shape = 'u8[4096]{0}', space=vmem, size = 0x1000, scoped, tag = 'output window, operand 0, single buffered']
    #allocation4 [shape = 's32[1]{0}', space=sflag, size = 0x4, scoped, tag = 'scoped memory for _lambda_.1']
    %8 = vsyncpa [#allocation4], 0
    // Predicated region
    $region2: #{_lambda_.1} parent=1 // pred_check
      _
    $region3: #{_lambda_.1} parent=1 // pred_check_branch
      %10 = sbr.rel (0) target = $region5
    $region4: #{_lambda_.1} parent=1 // pred_region
      _
    $region5: #{_lambda_.1} parent=1 // pred_fallthru
      _
    // Predicated region
    $region6: #{_lambda_.1} parent=1 // pred_check
      _
    $region7: #{_lambda_.1} parent=1 // pred_check_branch
      %12 = sbr.rel (0) target = $region9
    $region8: #{_lambda_.1} parent=1 // pred_region
      _
    $region9: #{_lambda_.1} parent=1 // pred_fallthru
      _
    // Predicated region
    $region10: #{_lambda_.1} parent=1 // pred_check
      _
    $region11: #{_lambda_.1} parent=1 // pred_check_branch
      %14 = sbr.rel (0) target = $region13
    $region12: #{_lambda_.1} parent=1 // pred_region
      _
    $region13: #{_lambda_.1} parent=1 // pred_fallthru
      _
    %p16 = scmp.eq.s32.totalorder 0, 0
    // Predicated region
    $region14: #{_lambda_.1} parent=1 // pred_check
      %p17 = pneg %p16
    $region15: #{_lambda_.1} parent=1 // pred_check_branch
      %19 = sbr.rel (%p17) target = $region17
    $region16: #{_lambda_.1} parent=1 // pred_region
      %v20 = vld [vmem:[%s0] sm:$0xff]
      %v21 = vpack.c.bf16 %v20, %v20
      %22 = vst [vmem:[#allocation2] sm:$0xf] %v21
      %v23 = vtanh.pop %v20
      %v24 = vpack.c.bf16 %v23, %v23
      %25 = vst [vmem:[#allocation2 + $0x4] sm:$0xf] %v24
    $region17: #{_lambda_.1} parent=1 // pred_fallthru
      _
    %v26 = vld [vmem:[#allocation2] sm:$0xff]
    %v27 = vld [vmem:[%s1] sm:$0xf]
    %v28 = vld [vmem:[%s1 + $0x4] sm:$0xf]
    %v29 = vld [vmem:[%s1 + $0x8] sm:$0xf]
    %v30 = vld [vmem:[%s1 + $0xc] sm:$0xf]
    %v31 = vld [vmem:[%s1 + $0x10] sm:$0xf]
    %v32 = vld [vmem:[%s1 + $0x14] sm:$0xf]
    %v33 = vld [vmem:[%s1 + $0x18] sm:$0xf]
    %v34 = vld [vmem:[%s1 + $0x1c] sm:$0xf]
    %v35 = vld [vmem:[%s1 + $0x20] sm:$0xf]
    %v36 = vld [vmem:[%s1 + $0x24] sm:$0xf]
    %v37 = vld [vmem:[%s1 + $0x28] sm:$0xf]
    %v38 = vld [vmem:[%s1 + $0x2c] sm:$0xf]
    %v39 = vld [vmem:[%s1 + $0x30] sm:$0xf]
    %v40 = vld [vmem:[%s1 + $0x34] sm:$0xf]
    %v41 = vld [vmem:[%s1 + $0x38] sm:$0xf]
    %v42 = vld [vmem:[%s1 + $0x3c] sm:$0xf]
    %v43 = vld [vmem:[%s1 + $0x40] sm:$0xf]
    %v44 = vld [vmem:[%s1 + $0x44] sm:$0xf]
    %v45 = vld [vmem:[%s1 + $0x48] sm:$0xf]
    %v46 = vld [vmem:[%s1 + $0x4c] sm:$0xf]
    %v47 = vld [vmem:[%s1 + $0x50] sm:$0xf]
    %v48 = vld [vmem:[%s1 + $0x54] sm:$0xf]
    %v49 = vld [vmem:[%s1 + $0x58] sm:$0xf]
    %v50 = vld [vmem:[%s1 + $0x5c] sm:$0xf]
    %v51 = vld [vmem:[%s1 + $0x60] sm:$0xf]
    %v52 = vld [vmem:[%s1 + $0x64] sm:$0xf]
    %v53 = vld [vmem:[%s1 + $0x68] sm:$0xf]
    %v54 = vld [vmem:[%s1 + $0x6c] sm:$0xf]
    %v55 = vld [vmem:[%s1 + $0x70] sm:$0xf]
    %v56 = vld [vmem:[%s1 + $0x74] sm:$0xf]
    %v57 = vld [vmem:[%s1 + $0x78] sm:$0xf]
    %v58 = vld [vmem:[%s1 + $0x7c] sm:$0xf]
    %v59 = vld [vmem:[%s2] sm:$0x1]
    %v61 = vlaneseq
    %v62 = vshrl.u32 %v61, 7
    %v63 = vsub.s32 0, %v62
    %v64 = vrot.slane %v59, %v63
    %v67 = vunpack.c.l.b16 %v26
    %v68 = vunpack.c.h.b16 %v26
    %v69 = vpack.c.b16 %v67, %v67
    %v70 = vpack.c.b16 %v68, %v68
    %v105 = vunpack.c.l.b16 %v27
    %v106 = vunpack.c.l.b16 %v28
    %v107 = vunpack.c.l.b16 %v29
    %v108 = vunpack.c.l.b16 %v30
    %v109 = vunpack.c.l.b16 %v31
    %v110 = vunpack.c.l.b16 %v32
    %v111 = vunpack.c.l.b16 %v33
    %v112 = vunpack.c.l.b16 %v34
    %v113 = vunpack.c.l.b16 %v35
    %v114 = vunpack.c.l.b16 %v36
    %v115 = vunpack.c.l.b16 %v37
    %v116 = vunpack.c.l.b16 %v38
    %v117 = vunpack.c.l.b16 %v39
    %v118 = vunpack.c.l.b16 %v40
    %v119 = vunpack.c.l.b16 %v41
    %v120 = vunpack.c.l.b16 %v42
    %v121 = vunpack.c.l.b16 %v43
    %v122 = vunpack.c.l.b16 %v44
    %v123 = vunpack.c.l.b16 %v45
    %v124 = vunpack.c.l.b16 %v46
    %v125 = vunpack.c.l.b16 %v47
    %v126 = vunpack.c.l.b16 %v48
    %v127 = vunpack.c.l.b16 %v49
    %v128 = vunpack.c.l.b16 %v50
    %v129 = vunpack.c.l.b16 %v51
    %v130 = vunpack.c.l.b16 %v52
    %v131 = vunpack.c.l.b16 %v53
    %v132 = vunpack.c.l.b16 %v54
    %v133 = vunpack.c.l.b16 %v55
    %v134 = vunpack.c.l.b16 %v56
    %v135 = vunpack.c.l.b16 %v57
    %v136 = vunpack.c.l.b16 %v58
    %v137 = vpack.c.b16 %v106, %v105
    %v138 = vpack.c.b16 %v108, %v107
    %v139 = vpack.c.b16 %v110, %v109
    %v140 = vpack.c.b16 %v112, %v111
    %v141 = vpack.c.b16 %v114, %v113
    %v142 = vpack.c.b16 %v116, %v115
    %v143 = vpack.c.b16 %v118, %v117
    %v144 = vpack.c.b16 %v120, %v119
    %v145 = vpack.c.b16 %v122, %v121
    %v146 = vpack.c.b16 %v124, %v123
    %v147 = vpack.c.b16 %v126, %v125
    %v148 = vpack.c.b16 %v128, %v127
    %v149 = vpack.c.b16 %v130, %v129
    %v150 = vpack.c.b16 %v132, %v131
    %v151 = vpack.c.b16 %v134, %v133
    %v152 = vpack.c.b16 %v136, %v135
    %169 = vmatprep.subr.bf16.mxu0 0
    %170 = vmatpush1.bf16.msra.mxu0 %v137
    %171 = vmatprep.subr.bf16.mxu0 0
    %172 = vmatpush1.bf16.msra.mxu0 %v138
    %173 = vmatprep.subr.bf16.mxu0 0
    %174 = vmatpush1.bf16.msra.mxu0 %v139
    %175 = vmatprep.subr.bf16.mxu0 0
    %176 = vmatpush1.bf16.msra.mxu0 %v140
    %177 = vmatprep.subr.bf16.mxu0 0
    %178 = vmatpush1.bf16.msra.mxu0 %v141
    %179 = vmatprep.subr.bf16.mxu0 0
    %180 = vmatpush1.bf16.msra.mxu0 %v142
    %181 = vmatprep.subr.bf16.mxu0 0
    %182 = vmatpush1.bf16.msra.mxu0 %v143
    %183 = vmatprep.subr.bf16.mxu0 0
    %184 = vmatpush1.bf16.msra.mxu0 %v144
    %185 = vmatprep.subr.bf16.mxu0 0
    %186 = vmatpush1.bf16.msra.mxu0 %v145
    %187 = vmatprep.subr.bf16.mxu0 0
    %188 = vmatpush1.bf16.msra.mxu0 %v146
    %189 = vmatprep.subr.bf16.mxu0 0
    %190 = vmatpush1.bf16.msra.mxu0 %v147
    %191 = vmatprep.subr.bf16.mxu0 0
    %192 = vmatpush1.bf16.msra.mxu0 %v148
    %193 = vmatprep.subr.bf16.mxu0 0
    %194 = vmatpush1.bf16.msra.mxu0 %v149
    %195 = vmatprep.subr.bf16.mxu0 0
    %196 = vmatpush1.bf16.msra.mxu0 %v150
    %197 = vmatprep.subr.bf16.mxu0 0
    %198 = vmatpush1.bf16.msra.mxu0 %v151
    %199 = vmatprep.subr.bf16.mxu0 0
    %200 = vmatpush1.bf16.msra.mxu0 %v152
    %201 = vmatprep.mubr.bf16.mxu0 %v70
    %202 = vmatmul.mubr.bf16.gmra.mrb[0].mxu0 %v69
    %v203 = vpop.f32.mrb[0].mxu0
    %v204 = vadd.f32 %v64, %v203
    %v205 = vpop.f32.mrb[0].mxu0
    %v206 = vpop.f32.mrb[0].mxu0
    %v207 = vpop.f32.mrb[0].mxu0
    %208 = vdwg.mxu0
    %209 = vst [vmem:[#allocation3] sm:$0xff] %v204
    // Predicated region
    $region18: #{_lambda_.1} parent=1 // pred_check
      _
    $region19: #{_lambda_.1} parent=1 // pred_check_branch
      %211 = sbr.rel (0) target = $region21
    $region20: #{_lambda_.1} parent=1 // pred_region
      %s213 = ssub.s32 128, 128
      %214 = vsyncadd [#allocation4], %s213
      %s216 = sshll.u32 [#allocation3], 4
      %s217 = int_to_ptr.vmem [resolvable:$true] %s216
      %219 = dma.vmem_to_hbm [thread:$0]  %s217, 128, %s3, [#allocation4]
    $region21: #{_lambda_.1} parent=1 // pred_fallthru
      _
    // Predicated region
    $region22: #{_lambda_.1} parent=1 // pred_check
      _
    $region23: #{_lambda_.1} parent=1 // pred_check_branch
      %221 = sbr.rel (0) target = $region25
    $region24: #{_lambda_.1} parent=1 // pred_region
      %222 = dma.done [#allocation4], 128
    $region25: #{_lambda_.1} parent=1 // pred_fallthru
      _
    %223 = vsyncpa [#allocation4], 1

</llo_original>
